<compile_context>
chip_gen: v7x
topology: tpu7x:2x2x1
jax: 0.10.0
libtpu: 0.0.40
codegen_flags: <defaults>
</compile_context>

<pallas_src>
import functools
import numpy as np
import jax
import jax.numpy as jnp
from jax.experimental import pallas as pl
from jax.experimental.pallas import tpu as pltpu


# --------------------------------- kernel ------------------------------------

def _block_kernel(x_ref, w1t_ref, b1_ref, wdw_ref, w2t_ref, b3_ref, mask_ref,
                  *rest, stride, H, W, Nb):
    """Nb images of the ShuffleNetV1 block; activations live as (C, Nb*HW).

    x_ref   : (Cin, Nb*HW)  input slab (channels on sublanes, pixels on lanes)
    w1t_ref : (mid, Cin)    grouped 1x1 conv1: BN1 scale + channel shuffle folded
    b1_ref  : (mid, 1)      BN1 shift (shuffle-permuted)
    wdw_ref : (mid, 9)      depthwise 3x3 weights, BN2 scale folded (tap = 3*di+dj)
    w2t_ref : (cp, mid)     grouped 1x1 conv2, BN3 scale folded
    b3_ref  : (cp, 1)       BN3 shift with BN2 shift folded through conv2
    mask_ref: (9, Nb*HW)    per-tap border masks (kill roll wrap / image edges)
    stride==1: rest = (o_ref,)           o_ref: (Cout, Nb*HW)   (Cout == Cin)
    stride==2: rest = (sel_ref, o_ref)   sel_ref: (HW, P) 0/1 subsample,
                                         o_ref: (cp+Cin, Nb*P)
    """
    if stride == 2:
        sel_ref, o_ref = rest
    else:
        (o_ref,) = rest

    HW = H * W
    x = x_ref[...]                                # (Cin, Nb*HW), f32, lane-dense
    cin = x.shape[0]

    # conv1: grouped 1x1 (channel shuffle + BN1 scale folded) + shift + ReLU
    w1t = w1t_ref[...]
    h = jnp.dot(w1t, x.astype(w1t.dtype), preferred_element_type=jnp.float32)
    h = jnp.maximum(h + b1_ref[...], 0.0)         # (mid, Nb*HW)
    mid = h.shape[0]

    masks = mask_ref[...]                         # (9, Nb*HW)

    def taps9(a, w=None):
        # 3x3 neighbourhood via lane rolls + border masks (centre tap seeds acc).
        acc = a if w is None else a * w[:, 4:5]
        for di in range(3):
            for dj in range(3):
                if di == 1 and dj == 1:
                    continue
                t = 3 * di + dj
                off = (di - 1) * W + (dj - 1)     # flat offset of the source pixel
                tap = jnp.roll(a, -off, axis=-1) * masks[t:t + 1, :]
                acc = acc + (tap if w is None else tap * w[:, t:t + 1])
        return acc

    # depthwise 3x3 at full resolution; BN2 shift is folded into b3 host-side
    d_full = taps9(h, wdw_ref[...])               # (mid, Nb*HW)

    w2t = w2t_ref[...]
    if stride == 1:
        e = jnp.dot(w2t, d_full.astype(w2t.dtype),
                    preferred_element_type=jnp.float32) + b3_ref[...]
        o_ref[...] = jnp.maximum(e + x, 0.0)      # residual add + ReLU (f32)
    else:
        # identity branch: AvgPool2d(k=3, stride=2, pad=1), count_include_pad -> /9
        psum = taps9(x)                           # (cin, Nb*HW) box sum
        stacked = jnp.concatenate([d_full, psum], axis=0)       # (mid+cin, Nb*HW)
        sel = sel_ref[...]                        # (HW, P) 0/1 stride-2 subsample
        subs = [jnp.dot(stacked[:, n * HW:(n + 1) * HW], sel,
                        preferred_element_type=jnp.float32) for n in range(Nb)]
        sub = subs[0] if Nb == 1 else jnp.concatenate(subs, axis=-1)  # (mid+cin, Nb*P)
        e = jnp.dot(w2t, sub[:mid, :].astype(w2t.dtype),
                    preferred_element_type=jnp.float32) + b3_ref[...]
        pooled = sub[mid:mid + cin, :] * (1.0 / 9.0)
        # relu(concat(a, b)) == concat(relu(a), relu(b)); single lane-dense store
        o_ref[...] = jnp.maximum(jnp.concatenate([e, pooled], axis=0), 0.0)


# ----------------------------- host-side glue --------------------------------

def _dense_1x1(w, groups):
    # torch grouped 1x1 conv weight (Cout, Cin//groups, 1, 1) -> dense (Cin, Cout)
    w = np.asarray(w, np.float32)
    cout, ipg = w.shape[0], w.shape[1]
    cin, opg = ipg * groups, cout // groups
    dense = np.zeros((cin, cout), np.float32)
    for g in range(groups):
        dense[g * ipg:(g + 1) * ipg, g * opg:(g + 1) * opg] = \
            w[g * opg:(g + 1) * opg, :, 0, 0].T
    return dense


def _fold_bn(bn, eps=1e-5):
    gamma, beta, mean, var = (np.asarray(a, np.float32) for a in bn)
    scale = gamma / np.sqrt(var + eps)
    shift = beta - mean * scale
    return scale, shift


def _pick_nb(N, HW, P):
    """Images per grid step: keep blocks lane-dense, grid >= 2 when possible."""
    def lane_ok(nb):
        return nb == N or ((nb * HW) % 128 == 0 and (nb * P) % 128 == 0)
    cands = [d for d in range(1, N + 1) if N % d == 0 and lane_ok(d)]
    def score(nb):
        return ((nb * P) % 128 == 0,      # lane-dense output stores
                (N // nb) >= 2,           # >=2 grid steps (v7x: both TCs busy)
                nb <= 8,                  # keep the per-step slab modest
                -abs(nb - 8))             # prefer ~8 images per step
    return max(cands, key=score)


def shufflenet_v1_block_pallas(x_nchw, params, *, stride, groups, first_group,
                               use_bf16=False):
    N, Cin, H, W = x_nchw.shape
    HW = H * W
    mid = params["w1"].shape[0]
    cp = params["w2"].shape[0]            # out channels of the conv path
    g1 = 1 if first_group else groups
    Ho = (H - 1) // stride + 1
    Wo = (W - 1) // stride + 1
    P = Ho * Wo
    Nb = _pick_nb(N, HW, P)
    L = Nb * HW
    n_steps = N // Nb
    wdt = jnp.bfloat16 if use_bf16 else jnp.float32

    # --- fold BN scales, channel shuffle and the BN2 shift into the weights ---
    w1d = _dense_1x1(params["w1"], g1)                        # (Cin, mid)
    s1, b1 = _fold_bn(params["bn1"])
    gch = mid // groups
    perm = np.array([(k % gch) * groups + (k // gch) for k in range(mid)])
    w1t = np.ascontiguousarray((w1d[:, perm] * s1[perm][None, :]).T)   # (mid, Cin)
    b1v = b1[perm].reshape(mid, 1)

    s2, b2 = _fold_bn(params["bn2"])
    wdw = np.asarray(params["wdw"], np.float32).reshape(mid, 9) * s2[:, None]

    w2d = _dense_1x1(params["w2"], groups)                    # (mid, cp)
    s3, b3 = _fold_bn(params["bn3"])
    w2t = np.ascontiguousarray((w2d * s3[None, :]).T)         # (cp, mid)
    b3v = (b3 + w2t @ b2).reshape(cp, 1)    # BN2 shift folded through conv2

    # --- per-tap border masks (structure repeats per image -> tile over Nb) ---
    r = np.arange(HW) // W
    c = np.arange(HW) % W
    row_ok = [r >= 1, np.ones(HW, bool), r <= H - 2]
    col_ok = [c >= 1, np.ones(HW, bool), c <= W - 2]
    masks = np.zeros((9, HW), np.float32)
    for di in range(3):
        for dj in range(3):
            masks[3 * di + dj] = (row_ok[di] & col_ok[dj]).astype(np.float32)
    masks = np.tile(masks, (1, Nb))                            # (9, L)

    # images batched along the lane axis: (Cin, N*HW)
    x_cl = jnp.asarray(x_nchw, jnp.float32).reshape(N, Cin, HW)
    x_cl = x_cl.transpose(1, 0, 2).reshape(Cin, N * HW)

    def const_spec(shape):
        return pl.BlockSpec(shape, lambda i: (0,) * len(shape))

    in_specs = [
        pl.BlockSpec((Cin, L), lambda i: (0, i)),
        const_spec((mid, Cin)), const_spec((mid, 1)),
        const_spec((mid, 9)),
        const_spec((cp, mid)), const_spec((cp, 1)),
        const_spec((9, L)),
    ]
    args = [x_cl, jnp.asarray(w1t, wdt), jnp.asarray(b1v), jnp.asarray(wdw),
            jnp.asarray(w2t, wdt), jnp.asarray(b3v), jnp.asarray(masks)]

    flops = 2 * mid * Cin * L + 27 * mid * L
    if stride == 2:
        sel = np.zeros((HW, P), np.float32)
        for ho in range(Ho):
            for wo in range(Wo):
                sel[(stride * ho) * W + stride * wo, ho * Wo + wo] = 1.0
        in_specs.append(const_spec((HW, P)))
        args.append(jnp.asarray(sel))
        cout, pout = cp + Cin, P
        flops += 27 * Cin * L + 2 * (mid + Cin) * HW * P * Nb + 2 * cp * mid * Nb * P
    else:
        cout, pout = cp, HW
        flops += 2 * cp * mid * L
    flops *= n_steps
    bytes_acc = 4 * (int(x_cl.size) + cout * N * pout) + \
        n_steps * sum(int(a.size) * a.dtype.itemsize for a in args[1:])

    fn = pl.pallas_call(
        functools.partial(_block_kernel, stride=stride, H=H, W=W, Nb=Nb),
        out_shape=jax.ShapeDtypeStruct((cout, N * pout), jnp.float32),
        grid_spec=pltpu.PrefetchScalarGridSpec(
            num_scalar_prefetch=0, grid=(n_steps,),
            in_specs=in_specs,
            out_specs=pl.BlockSpec((cout, Nb * pout), lambda i: (0, i))),
        compiler_params=pltpu.CompilerParams(
            dimension_semantics=("parallel",)),
        cost_estimate=pl.CostEstimate(flops=int(flops), transcendentals=0,
                                      bytes_accessed=int(bytes_acc)),
    )
    out = fn(*args)                                         # (cout, N*pout)
    # In a full network the (C, N*HW) layout would be carried between blocks;
    # here we convert back to NCHW at the boundary.
    return out.reshape(cout, N, Ho, Wo).transpose(1, 0, 2, 3)


# -------------------- deterministic parameter initialisation -----------------

def init_block_params(key, in_ch, out_ch, mid_ch, stride, groups, first_group):
    g1 = 1 if first_group else groups
    cp = out_ch - in_ch if stride == 2 else out_ch
    ks = jax.random.split(key, 6)

    def bn_init(k, c):
        k1, k2, k3, k4 = jax.random.split(k, 4)
        gamma = 1.0 + 0.1 * jax.random.normal(k1, (c,), jnp.float32)
        beta = 0.1 * jax.random.normal(k2, (c,), jnp.float32)
        mean = 0.1 * jax.random.normal(k3, (c,), jnp.float32)
        var = 0.5 + jax.random.uniform(k4, (c,), jnp.float32)
        return tuple(np.asarray(a) for a in (gamma, beta, mean, var))

    return dict(
        w1=np.asarray(0.2 * jax.random.normal(ks[0], (mid_ch, in_ch // g1, 1, 1), jnp.float32)),
        wdw=np.asarray(0.2 * jax.random.normal(ks[1], (mid_ch, 1, 3, 3), jnp.float32)),
        w2=np.asarray(0.2 * jax.random.normal(ks[2], (cp, mid_ch // groups, 1, 1), jnp.float32)),
        bn1=bn_init(ks[3], mid_ch),
        bn2=bn_init(ks[4], mid_ch),
        bn3=bn_init(ks[5], cp),
    )


# ------------------------ numpy reference (PyTorch semantics) ----------------

def _np_bn(y, bn, eps=1e-5):
    gamma, beta, mean, var = (np.asarray(a, np.float64) for a in bn)
    inv = gamma / np.sqrt(var + eps)
    return y * inv[None, :, None, None] + (beta - mean * inv)[None, :, None, None]


def _np_grouped_1x1(x, w, groups):
    N, Cin, H, W = x.shape
    w = np.asarray(w, np.float64)
    cout = w.shape[0]
    ipg, opg = Cin // groups, cout // groups
    out = np.zeros((N, cout, H, W), np.float64)
    for g in range(groups):
        out[:, g * opg:(g + 1) * opg] = np.einsum(
            'oc,nchw->nohw', w[g * opg:(g + 1) * opg, :, 0, 0], x[:, g * ipg:(g + 1) * ipg])
    return out


def _np_dw3x3(x, w, stride):
    N, C, H, W = x.shape
    w = np.asarray(w, np.float64)
    xp = np.pad(x, ((0, 0), (0, 0), (1, 1), (1, 1)))
    Ho = (H - 1) // stride + 1
    Wo = (W - 1) // stride + 1
    out = np.zeros((N, C, Ho, Wo), np.float64)
    for di in range(3):
        for dj in range(3):
            out += (w[:, 0, di, dj][None, :, None, None] *
                    xp[:, :, di:di + stride * (Ho - 1) + 1:stride,
                             dj:dj + stride * (Wo - 1) + 1:stride])
    return out


def shufflenet_v1_block_ref(x, p, *, stride, groups, first_group):
    x = np.asarray(x, np.float64)
    g1 = 1 if first_group else groups
    h = np.maximum(_np_bn(_np_grouped_1x1(x, p["w1"], g1), p["bn1"]), 0.0)
    N, C, H, W = h.shape
    h = h.reshape(N, C // groups, groups, H, W).transpose(0, 2, 1, 3, 4).reshape(N, C, H, W)
    d = _np_bn(_np_dw3x3(h, p["wdw"], stride), p["bn2"])
    e = _np_bn(_np_grouped_1x1(d, p["w2"], groups), p["bn3"])
    if stride == 1:
        return np.maximum(e + x, 0.0)
    avg = _np_dw3x3(x, np.ones((x.shape[1], 1, 3, 3)) / 9.0, 2)
    return np.maximum(np.concatenate([e, avg], axis=1), 0.0)


if __name__ == "__main__":
    key = jax.random.PRNGKey(0)
    k_x1, k_x2, k_p1, k_p2 = jax.random.split(key, 4)

    # stride=1 residual block (in_ch == out_ch); Nb=2 images per grid step, grid=2
    cfg1 = dict(in_ch=16, out_ch=16, mid_ch=8, stride=1, groups=2, first_group=False)
    x1 = jax.random.normal(k_x1, (4, cfg1["in_ch"], 16, 16), jnp.float32)
    p1 = init_block_params(k_p1, **cfg1)
    y1 = jax.block_until_ready(
        shufflenet_v1_block_pallas(x1, p1, stride=1, groups=2, first_group=False))
    r1 = shufflenet_v1_block_ref(np.asarray(x1), p1, stride=1, groups=2, first_group=False)
    np.testing.assert_allclose(np.asarray(y1), r1, rtol=2e-2, atol=2e-3)

    # stride=2 downsampling block: avg-pool identity branch + channel concat,
    # lane-dense (cout, Nb*P = 128) output slab
    cfg2 = dict(in_ch=8, out_ch=24, mid_ch=8, stride=2, groups=2, first_group=True)
    x2 = jax.random.normal(k_x2, (4, cfg2["in_ch"], 16, 16), jnp.float32)
    p2 = init_block_params(k_p2, **cfg2)
    y2 = jax.block_until_ready(
        shufflenet_v1_block_pallas(x2, p2, stride=2, groups=2, first_group=True))
    r2 = shufflenet_v1_block_ref(np.asarray(x2), p2, stride=2, groups=2, first_group=True)
    np.testing.assert_allclose(np.asarray(y2), r2, rtol=2e-2, atol=2e-3)

    print("KERNEL_OK")
</pallas_src>

<mosaic_0001>
module attributes {stable_mosaic.version = 11 : i64} {
  func.func @_block_kernel(%arg0: i32, %arg1: memref<16x512xf32, #tpu.memory_space<vmem>>, %arg2: memref<8x16xf32, #tpu.memory_space<vmem>>, %arg3: memref<8x1xf32, #tpu.memory_space<vmem>>, %arg4: memref<8x9xf32, #tpu.memory_space<vmem>>, %arg5: memref<16x8xf32, #tpu.memory_space<vmem>>, %arg6: memref<16x1xf32, #tpu.memory_space<vmem>>, %arg7: memref<9x512xf32, #tpu.memory_space<vmem>>, %arg8: memref<16x512xf32, #tpu.memory_space<vmem>>) attributes {dimension_semantics = [#tpu.dimension_semantics<parallel>], iteration_bounds = array<i64: 2>, scalar_prefetch = 0 : i64, scratch_operands = 0 : i64, tpu.core_type = #tpu.core_type<tc>, window_params = [{transform_indices = @transform_0, window_bounds = array<i64: 16, 512>}, {pipeline_mode = #tpu.pipeline_mode<synchronous>, transform_indices = @transform_1, window_bounds = array<i64: 8, 16>}, {pipeline_mode = #tpu.pipeline_mode<synchronous>, transform_indices = @transform_2, window_bounds = array<i64: 8, 1>}, {pipeline_mode = #tpu.pipeline_mode<synchronous>, transform_indices = @transform_3, window_bounds = array<i64: 8, 9>}, {pipeline_mode = #tpu.pipeline_mode<synchronous>, transform_indices = @transform_4, window_bounds = array<i64: 16, 8>}, {pipeline_mode = #tpu.pipeline_mode<synchronous>, transform_indices = @transform_5, window_bounds = array<i64: 16, 1>}, {pipeline_mode = #tpu.pipeline_mode<synchronous>, transform_indices = @transform_6, window_bounds = array<i64: 9, 512>}, {transform_indices = @transform_7, window_bounds = array<i64: 16, 512>}]} {
    %c0 = arith.constant 0 : index
    %c0_0 = arith.constant 0 : index
    %0 = vector.load %arg1[%c0, %c0_0] : memref<16x512xf32, #tpu.memory_space<vmem>>, vector<16x512xf32>
    %c0_1 = arith.constant 0 : index
    %c0_2 = arith.constant 0 : index
    %1 = vector.load %arg2[%c0_1, %c0_2] : memref<8x16xf32, #tpu.memory_space<vmem>>, vector<8x16xf32>
    %cst = arith.constant dense<0.000000e+00> : vector<8x512xf32>
    %2 = tpu.matmul %1, %0, %cst {dimension_numbers = #tpu.dot_dimension_numbers<[1], [0], [0], [1], [0, 0, 1, 1], [], []>} : vector<8x16xf32>, vector<16x512xf32>, vector<8x512xf32> -> vector<8x512xf32>
    %c0_3 = arith.constant 0 : index
    %c0_4 = arith.constant 0 : index
    %3 = vector.load %arg3[%c0_3, %c0_4] : memref<8x1xf32, #tpu.memory_space<vmem>>, vector<8x1xf32>
    %4 = vector.broadcast %3 : vector<8x1xf32> to vector<8x512xf32>
    %5 = arith.addf %2, %4 : vector<8x512xf32>
    %cst_5 = arith.constant 0.000000e+00 : f32
    %6 = vector.broadcast %cst_5 : f32 to vector<8x512xf32>
    %7 = arith.maximumf %5, %6 : vector<8x512xf32>
    %c0_6 = arith.constant 0 : index
    %c0_7 = arith.constant 0 : index
    %8 = vector.load %arg7[%c0_6, %c0_7] : memref<9x512xf32, #tpu.memory_space<vmem>>, vector<9x512xf32>
    %c0_8 = arith.constant 0 : index
    %c0_9 = arith.constant 0 : index
    %9 = vector.load %arg4[%c0_8, %c0_9] : memref<8x9xf32, #tpu.memory_space<vmem>>, vector<8x9xf32>
    %10 = vector.extract_strided_slice %9 {offsets = [0, 4], sizes = [8, 1], strides = [1, 1]} : vector<8x9xf32> to vector<8x1xf32>
    %11 = vector.broadcast %10 : vector<8x1xf32> to vector<8x512xf32>
    %12 = arith.mulf %7, %11 : vector<8x512xf32>
    %13 = vector.extract_strided_slice %7 {offsets = [0, 495], sizes = [8, 17], strides = [1, 1]} : vector<8x512xf32> to vector<8x17xf32>
    %14 = vector.extract_strided_slice %7 {offsets = [0, 0], sizes = [8, 495], strides = [1, 1]} : vector<8x512xf32> to vector<8x495xf32>
    %15 = tpu.concatenate %13, %14 in 1 : vector<8x17xf32>, vector<8x495xf32> -> vector<8x512xf32>
    %16 = vector.extract_strided_slice %8 {offsets = [0, 0], sizes = [1, 512], strides = [1, 1]} : vector<9x512xf32> to vector<1x512xf32>
    %17 = vector.broadcast %16 : vector<1x512xf32> to vector<8x512xf32>
    %18 = arith.mulf %15, %17 : vector<8x512xf32>
    %19 = vector.extract_strided_slice %9 {offsets = [0, 0], sizes = [8, 1], strides = [1, 1]} : vector<8x9xf32> to vector<8x1xf32>
    %20 = vector.broadcast %19 : vector<8x1xf32> to vector<8x512xf32>
    %21 = arith.mulf %18, %20 : vector<8x512xf32>
    %22 = arith.addf %12, %21 : vector<8x512xf32>
    %23 = vector.extract_strided_slice %7 {offsets = [0, 496], sizes = [8, 16], strides = [1, 1]} : vector<8x512xf32> to vector<8x16xf32>
    %24 = vector.extract_strided_slice %7 {offsets = [0, 0], sizes = [8, 496], strides = [1, 1]} : vector<8x512xf32> to vector<8x496xf32>
    %25 = tpu.concatenate %23, %24 in 1 : vector<8x16xf32>, vector<8x496xf32> -> vector<8x512xf32>
    %26 = vector.extract_strided_slice %8 {offsets = [1, 0], sizes = [1, 512], strides = [1, 1]} : vector<9x512xf32> to vector<1x512xf32>
    %27 = vector.broadcast %26 : vector<1x512xf32> to vector<8x512xf32>
    %28 = arith.mulf %25, %27 : vector<8x512xf32>
    %29 = vector.extract_strided_slice %9 {offsets = [0, 1], sizes = [8, 1], strides = [1, 1]} : vector<8x9xf32> to vector<8x1xf32>
    %30 = vector.broadcast %29 : vector<8x1xf32> to vector<8x512xf32>
    %31 = arith.mulf %28, %30 : vector<8x512xf32>
    %32 = arith.addf %22, %31 : vector<8x512xf32>
    %33 = vector.extract_strided_slice %7 {offsets = [0, 497], sizes = [8, 15], strides = [1, 1]} : vector<8x512xf32> to vector<8x15xf32>
    %34 = vector.extract_strided_slice %7 {offsets = [0, 0], sizes = [8, 497], strides = [1, 1]} : vector<8x512xf32> to vector<8x497xf32>
    %35 = tpu.concatenate %33, %34 in 1 : vector<8x15xf32>, vector<8x497xf32> -> vector<8x512xf32>
    %36 = vector.extract_strided_slice %8 {offsets = [2, 0], sizes = [1, 512], strides = [1, 1]} : vector<9x512xf32> to vector<1x512xf32>
    %37 = vector.broadcast %36 : vector<1x512xf32> to vector<8x512xf32>
    %38 = arith.mulf %35, %37 : vector<8x512xf32>
    %39 = vector.extract_strided_slice %9 {offsets = [0, 2], sizes = [8, 1], strides = [1, 1]} : vector<8x9xf32> to vector<8x1xf32>
    %40 = vector.broadcast %39 : vector<8x1xf32> to vector<8x512xf32>
    %41 = arith.mulf %38, %40 : vector<8x512xf32>
    %42 = arith.addf %32, %41 : vector<8x512xf32>
    %43 = vector.extract_strided_slice %7 {offsets = [0, 511], sizes = [8, 1], strides = [1, 1]} : vector<8x512xf32> to vector<8x1xf32>
    %44 = vector.extract_strided_slice %7 {offsets = [0, 0], sizes = [8, 511], strides = [1, 1]} : vector<8x512xf32> to vector<8x511xf32>
    %45 = tpu.concatenate %43, %44 in 1 : vector<8x1xf32>, vector<8x511xf32> -> vector<8x512xf32>
    %46 = vector.extract_strided_slice %8 {offsets = [3, 0], sizes = [1, 512], strides = [1, 1]} : vector<9x512xf32> to vector<1x512xf32>
    %47 = vector.broadcast %46 : vector<1x512xf32> to vector<8x512xf32>
    %48 = arith.mulf %45, %47 : vector<8x512xf32>
    %49 = vector.extract_strided_slice %9 {offsets = [0, 3], sizes = [8, 1], strides = [1, 1]} : vector<8x9xf32> to vector<8x1xf32>
    %50 = vector.broadcast %49 : vector<8x1xf32> to vector<8x512xf32>
    %51 = arith.mulf %48, %50 : vector<8x512xf32>
    %52 = arith.addf %42, %51 : vector<8x512xf32>
    %53 = vector.extract_strided_slice %7 {offsets = [0, 1], sizes = [8, 511], strides = [1, 1]} : vector<8x512xf32> to vector<8x511xf32>
    %54 = vector.extract_strided_slice %7 {offsets = [0, 0], sizes = [8, 1], strides = [1, 1]} : vector<8x512xf32> to vector<8x1xf32>
    %55 = tpu.concatenate %53, %54 in 1 : vector<8x511xf32>, vector<8x1xf32> -> vector<8x512xf32>
    %56 = vector.extract_strided_slice %8 {offsets = [5, 0], sizes = [1, 512], strides = [1, 1]} : vector<9x512xf32> to vector<1x512xf32>
    %57 = vector.broadcast %56 : vector<1x512xf32> to vector<8x512xf32>
    %58 = arith.mulf %55, %57 : vector<8x512xf32>
    %59 = vector.extract_strided_slice %9 {offsets = [0, 5], sizes = [8, 1], strides = [1, 1]} : vector<8x9xf32> to vector<8x1xf32>
    %60 = vector.broadcast %59 : vector<8x1xf32> to vector<8x512xf32>
    %61 = arith.mulf %58, %60 : vector<8x512xf32>
    %62 = arith.addf %52, %61 : vector<8x512xf32>
    %63 = vector.extract_strided_slice %7 {offsets = [0, 15], sizes = [8, 497], strides = [1, 1]} : vector<8x512xf32> to vector<8x497xf32>
    %64 = vector.extract_strided_slice %7 {offsets = [0, 0], sizes = [8, 15], strides = [1, 1]} : vector<8x512xf32> to vector<8x15xf32>
    %65 = tpu.concatenate %63, %64 in 1 : vector<8x497xf32>, vector<8x15xf32> -> vector<8x512xf32>
    %66 = vector.extract_strided_slice %8 {offsets = [6, 0], sizes = [1, 512], strides = [1, 1]} : vector<9x512xf32> to vector<1x512xf32>
    %67 = vector.broadcast %66 : vector<1x512xf32> to vector<8x512xf32>
    %68 = arith.mulf %65, %67 : vector<8x512xf32>
    %69 = vector.extract_strided_slice %9 {offsets = [0, 6], sizes = [8, 1], strides = [1, 1]} : vector<8x9xf32> to vector<8x1xf32>
    %70 = vector.broadcast %69 : vector<8x1xf32> to vector<8x512xf32>
    %71 = arith.mulf %68, %70 : vector<8x512xf32>
    %72 = arith.addf %62, %71 : vector<8x512xf32>
    %73 = vector.extract_strided_slice %7 {offsets = [0, 16], sizes = [8, 496], strides = [1, 1]} : vector<8x512xf32> to vector<8x496xf32>
    %74 = vector.extract_strided_slice %7 {offsets = [0, 0], sizes = [8, 16], strides = [1, 1]} : vector<8x512xf32> to vector<8x16xf32>
    %75 = tpu.concatenate %73, %74 in 1 : vector<8x496xf32>, vector<8x16xf32> -> vector<8x512xf32>
    %76 = vector.extract_strided_slice %8 {offsets = [7, 0], sizes = [1, 512], strides = [1, 1]} : vector<9x512xf32> to vector<1x512xf32>
    %77 = vector.broadcast %76 : vector<1x512xf32> to vector<8x512xf32>
    %78 = arith.mulf %75, %77 : vector<8x512xf32>
    %79 = vector.extract_strided_slice %9 {offsets = [0, 7], sizes = [8, 1], strides = [1, 1]} : vector<8x9xf32> to vector<8x1xf32>
    %80 = vector.broadcast %79 : vector<8x1xf32> to vector<8x512xf32>
    %81 = arith.mulf %78, %80 : vector<8x512xf32>
    %82 = arith.addf %72, %81 : vector<8x512xf32>
    %83 = vector.extract_strided_slice %7 {offsets = [0, 17], sizes = [8, 495], strides = [1, 1]} : vector<8x512xf32> to vector<8x495xf32>
    %84 = vector.extract_strided_slice %7 {offsets = [0, 0], sizes = [8, 17], strides = [1, 1]} : vector<8x512xf32> to vector<8x17xf32>
    %85 = tpu.concatenate %83, %84 in 1 : vector<8x495xf32>, vector<8x17xf32> -> vector<8x512xf32>
    %86 = vector.extract_strided_slice %8 {offsets = [8, 0], sizes = [1, 512], strides = [1, 1]} : vector<9x512xf32> to vector<1x512xf32>
    %87 = vector.broadcast %86 : vector<1x512xf32> to vector<8x512xf32>
    %88 = arith.mulf %85, %87 : vector<8x512xf32>
    %89 = vector.extract_strided_slice %9 {offsets = [0, 8], sizes = [8, 1], strides = [1, 1]} : vector<8x9xf32> to vector<8x1xf32>
    %90 = vector.broadcast %89 : vector<8x1xf32> to vector<8x512xf32>
    %91 = arith.mulf %88, %90 : vector<8x512xf32>
    %92 = arith.addf %82, %91 : vector<8x512xf32>
    %c0_10 = arith.constant 0 : index
    %c0_11 = arith.constant 0 : index
    %93 = vector.load %arg5[%c0_10, %c0_11] : memref<16x8xf32, #tpu.memory_space<vmem>>, vector<16x8xf32>
    %cst_12 = arith.constant dense<0.000000e+00> : vector<16x512xf32>
    %94 = tpu.matmul %93, %92, %cst_12 {dimension_numbers = #tpu.dot_dimension_numbers<[1], [0], [0], [1], [0, 0, 1, 1], [], []>} : vector<16x8xf32>, vector<8x512xf32>, vector<16x512xf32> -> vector<16x512xf32>
    %c0_13 = arith.constant 0 : index
    %c0_14 = arith.constant 0 : index
    %95 = vector.load %arg6[%c0_13, %c0_14] : memref<16x1xf32, #tpu.memory_space<vmem>>, vector<16x1xf32>
    %96 = vector.broadcast %95 : vector<16x1xf32> to vector<16x512xf32>
    %97 = arith.addf %94, %96 : vector<16x512xf32>
    %98 = arith.addf %97, %0 : vector<16x512xf32>
    %cst_15 = arith.constant 0.000000e+00 : f32
    %99 = vector.broadcast %cst_15 : f32 to vector<16x512xf32>
    %100 = arith.maximumf %98, %99 : vector<16x512xf32>
    %c0_16 = arith.constant 0 : index
    %c0_17 = arith.constant 0 : index
    %101 = vector.load %arg8[%c0_16, %c0_17] : memref<16x512xf32, #tpu.memory_space<vmem>>, vector<16x512xf32>
    tpu.vector_store %arg8[%c0_16, %c0_17], %100 {strides = array<i32>} : memref<16x512xf32, #tpu.memory_space<vmem>>, vector<16x512xf32>,
    return
  }
  func.func @transform_0(%arg0: i32) -> (i32, i32) {
    %c0_i32 = arith.constant 0 : i32
    %c0_i32_0 = arith.constant 0 : i32
    return %c0_i32, %arg0 : i32, i32
  }
  func.func @transform_1(%arg0: i32) -> (i32, i32) {
    %c0_i32 = arith.constant 0 : i32
    %c0_i32_0 = arith.constant 0 : i32
    %c0_i32_1 = arith.constant 0 : i32
    return %c0_i32, %c0_i32_0 : i32, i32
  }
  func.func @transform_2(%arg0: i32) -> (i32, i32) {
    %c0_i32 = arith.constant 0 : i32
    %c0_i32_0 = arith.constant 0 : i32
    %c0_i32_1 = arith.constant 0 : i32
    return %c0_i32, %c0_i32_0 : i32, i32
  }
  func.func @transform_3(%arg0: i32) -> (i32, i32) {
    %c0_i32 = arith.constant 0 : i32
    %c0_i32_0 = arith.constant 0 : i32
    %c0_i32_1 = arith.constant 0 : i32
    return %c0_i32, %c0_i32_0 : i32, i32
  }
  func.func @transform_4(%arg0: i32) -> (i32, i32) {
    %c0_i32 = arith.constant 0 : i32
    %c0_i32_0 = arith.constant 0 : i32
    %c0_i32_1 = arith.constant 0 : i32
    return %c0_i32, %c0_i32_0 : i32, i32
  }
  func.func @transform_5(%arg0: i32) -> (i32, i32) {
    %c0_i32 = arith.constant 0 : i32
    %c0_i32_0 = arith.constant 0 : i32
    %c0_i32_1 = arith.constant 0 : i32
    return %c0_i32, %c0_i32_0 : i32, i32
  }
  func.func @transform_6(%arg0: i32) -> (i32, i32) {
    %c0_i32 = arith.constant 0 : i32
    %c0_i32_0 = arith.constant 0 : i32
    %c0_i32_1 = arith.constant 0 : i32
    return %c0_i32, %c0_i32_0 : i32, i32
  }
  func.func @transform_7(%arg0: i32) -> (i32, i32) {
    %c0_i32 = arith.constant 0 : i32
    %c0_i32_0 = arith.constant 0 : i32
    return %c0_i32, %arg0 : i32, i32
  }
}

</mosaic_0001>

<llo_original>
// kernel: tpu_custom_call.1
$region0: #{tpu_custom_call.1}
  #allocation0 [shape = 'u32[]', space=smem, size = 0x4, offset = 0x4, fixed_abs, tag = 'smem constant byte address 0x4 - core index']
  #allocation1 [shape = 'u32[144,128]{1,0:T(1,128)}', space=vmem, size = 0x12000, scoped, tag = 'internal scratch']
  %s0 = inlined_call_operand.hbm [shape: f32[16,1024], index: 0, kind: input, shape index: {}]
  %s1 = inlined_call_operand.vmem [shape: f32[8,16], index: 1, kind: input, shape index: {}]
  %s2 = inlined_call_operand.vmem [shape: f32[8,1], index: 2, kind: input, shape index: {}]
  %s3 = inlined_call_operand.hbm [shape: f32[8,9], index: 3, kind: input, shape index: {}]
  %s4 = inlined_call_operand.vmem [shape: f32[16,8], index: 4, kind: input, shape index: {}]
  %s5 = inlined_call_operand.vmem [shape: f32[16,1], index: 5, kind: input, shape index: {}]
  %s6 = inlined_call_operand.vmem [shape: f32[9,512], index: 6, kind: input, shape index: {}]
  %s7 = inlined_call_operand.hbm [shape: f32[16,1024], index: 7, kind: output, shape index: {}]
  %s8 = sld [smem:[#allocation0]]
  $region69: #{tpu_custom_call.1} parent=0
    _
  %s10 = ssub.s32 1, %s8
  %s11 = scalar_select 0, %s10, %s8
  $region1: #{tpu_custom_call.1} parent=0
    #allocation2 [shape = 'u8[65536]{0}', space=vmem, size = 0x10000, scoped, tag = 'input window, operand 0']
    #allocation3 [shape = 's32[2]{0}', space=sflag, size = 0x8, scoped, tag = 'scoped memory for tpu_custom_call.1']
    #allocation4 [shape = 's32[2]{0}', space=sflag, size = 0x8, scoped, tag = 'scoped memory for tpu_custom_call.1']
    #allocation5 [shape = 'u8[4096]{0}', space=vmem, size = 0x1000, scoped, tag = 'input window, operand 3, single buffered']
    #allocation6 [shape = 's32[1]{0}', space=sflag, size = 0x4, scoped, tag = 'scoped memory for tpu_custom_call.1']
    #allocation7 [shape = 'u8[65536]{0}', space=vmem, size = 0x10000, scoped, tag = 'output window, operand 0']
    %12 = vsyncpa [#allocation3], 0
    %s13 = scalar_lea.sflag [#allocation3], 1
    %14 = vsyncpa %s13, 0
    %15 = vsyncpa [#allocation6], 0
    %16 = vsyncpa [#allocation4], 0
    %s17 = scalar_lea.sflag [#allocation4], 1
    %18 = vsyncpa %s17, 0
    loop: start=0, step=1, limit=4
    $region2: #{tpu_custom_call.1} parent=1 // loop_pre_header
      _
    $region3: #{tpu_custom_call.1} parent=1 // loop_header
      %s20 = sphi 0, %s24
      %p21 = scmp.ge.s32.totalorder %s20, 4
      %s30 = sphi 0, %s32
      %s33 = sphi 0, %s30
      %s34 = sphi 0, %s33
      %s50 = sphi 0, %s34
      %s54 = sphi 0, %s54
      %s56 = sphi 0, %s54
      %s57 = sphi 0, %s56
      %s71 = sphi 0, %s57
      %s75 = sphi 0, %s75
      %s77 = sphi 0, %s75
      %s78 = sphi 0, %s77
      %s92 = sphi 0, %s78
      %s96 = sphi 0, %s96
      %s98 = sphi 0, %s96
      %s99 = sphi 0, %s98
      %s113 = sphi 0, %s99
      %s117 = sphi 0, %s117
      %s119 = sphi 0, %s117
      %s120 = sphi 0, %s119
      %s134 = sphi 0, %s120
      %s138 = sphi 0, %s138
      %s140 = sphi 0, %s138
      %s141 = sphi 0, %s140
      %s155 = sphi 0, %s141
      %s159 = sphi 0, %s159
      %s161 = sphi 0, %s159
      %s162 = sphi 0, %s161
      %s176 = sphi 0, %s162
      %s182 = sphi 0, %s184
      %s185 = sphi 0, %s182
      %s186 = sphi 0, %s185
      %s202 = sphi 0, %s186
    $region4: #{tpu_custom_call.1} parent=1 // loop_header_branch
      %23 = sbr.rel (%p21) target = $region8
    $region5: #{tpu_custom_call.1} parent=1 // loop_body
      %s25 = ssub.s32 %s20, 1
      %s26 = ssub.s32 %s20, 2
      %s27 = sadd.s32 %s20, 1
      %s28 = ssub.s32 %s20, %s27
      %p29 = scmp.eq.s32.totalorder %s28, 0
      %s31 = sadd.s32 %s30, 1
      %s32 = scalar_select %p29, %s30, %s31
      %p35 = pneg %p29
      %p36 = scmp.eq.s32.totalorder %s20, 1
      %p37 = por %p35, %p36
      %p38 = scmp.ne.s32.totalorder %s30, %s33
      %p39 = scmp.eq.s32.totalorder %s20, 0
      %p40 = por %p38, %p39
      %p41 = scmp.ne.s32.totalorder %s30, %s33
      %p42 = scmp.eq.s32.totalorder %s25, 1
      %p43 = por %p41, %p42
      %p44 = scmp.ne.s32.totalorder %s33, %s34
      %p45 = scmp.eq.s32.totalorder %s25, 0
      %p46 = por %p44, %p45
      %p47 = scmp.ne.s32.totalorder %s33, %s34
      %p48 = scmp.eq.s32.totalorder %s26, 1
      %p49 = por %p47, %p48
      %p51 = scmp.ne.s32.totalorder %s34, %s50
      %p52 = scmp.eq.s32.totalorder %s26, 0
      %p53 = por %p51, %p52
      %s55 = sadd.s32 %s54, 1
      %p58 = scmp.eq.s32.totalorder %s20, 1
      %p59 = scmp.ne.s32.totalorder %s54, %s56
      %p60 = scmp.eq.s32.totalorder %s20, 0
      %p61 = por %p59, %p60
      %p62 = scmp.ne.s32.totalorder %s54, %s56
      %p63 = scmp.eq.s32.totalorder %s25, 1
      %p64 = por %p62, %p63
      %p65 = scmp.ne.s32.totalorder %s56, %s57
      %p66 = scmp.eq.s32.totalorder %s25, 0
      %p67 = por %p65, %p66
      %p68 = scmp.ne.s32.totalorder %s56, %s57
      %p69 = scmp.eq.s32.totalorder %s26, 1
      %p70 = por %p68, %p69
      %p72 = scmp.ne.s32.totalorder %s57, %s71
      %p73 = scmp.eq.s32.totalorder %s26, 0
      %p74 = por %p72, %p73
      %s76 = sadd.s32 %s75, 1
      %p79 = scmp.eq.s32.totalorder %s20, 1
      %p80 = scmp.ne.s32.totalorder %s75, %s77
      %p81 = scmp.eq.s32.totalorder %s20, 0
      %p82 = por %p80, %p81
      %p83 = scmp.ne.s32.totalorder %s75, %s77
      %p84 = scmp.eq.s32.totalorder %s25, 1
      %p85 = por %p83, %p84
      %p86 = scmp.ne.s32.totalorder %s77, %s78
      %p87 = scmp.eq.s32.totalorder %s25, 0
      %p88 = por %p86, %p87
      %p89 = scmp.ne.s32.totalorder %s77, %s78
      %p90 = scmp.eq.s32.totalorder %s26, 1
      %p91 = por %p89, %p90
      %p93 = scmp.ne.s32.totalorder %s78, %s92
      %p94 = scmp.eq.s32.totalorder %s26, 0
      %p95 = por %p93, %p94
      %s97 = sadd.s32 %s96, 1
      %p100 = scmp.eq.s32.totalorder %s20, 1
      %p101 = scmp.ne.s32.totalorder %s96, %s98
      %p102 = scmp.eq.s32.totalorder %s20, 0
      %p103 = por %p101, %p102
      %p104 = scmp.ne.s32.totalorder %s96, %s98
      %p105 = scmp.eq.s32.totalorder %s25, 1
      %p106 = por %p104, %p105
      %p107 = scmp.ne.s32.totalorder %s98, %s99
      %p108 = scmp.eq.s32.totalorder %s25, 0
      %p109 = por %p107, %p108
      %p110 = scmp.ne.s32.totalorder %s98, %s99
      %p111 = scmp.eq.s32.totalorder %s26, 1
      %p112 = por %p110, %p111
      %p114 = scmp.ne.s32.totalorder %s99, %s113
      %p115 = scmp.eq.s32.totalorder %s26, 0
      %p116 = por %p114, %p115
      %s118 = sadd.s32 %s117, 1
      %p121 = scmp.eq.s32.totalorder %s20, 1
      %p122 = scmp.ne.s32.totalorder %s117, %s119
      %p123 = scmp.eq.s32.totalorder %s20, 0
      %p124 = por %p122, %p123
      %p125 = scmp.ne.s32.totalorder %s117, %s119
      %p126 = scmp.eq.s32.totalorder %s25, 1
      %p127 = por %p125, %p126
      %p128 = scmp.ne.s32.totalorder %s119, %s120
      %p129 = scmp.eq.s32.totalorder %s25, 0
      %p130 = por %p128, %p129
      %p131 = scmp.ne.s32.totalorder %s119, %s120
      %p132 = scmp.eq.s32.totalorder %s26, 1
      %p133 = por %p131, %p132
      %p135 = scmp.ne.s32.totalorder %s120, %s134
      %p136 = scmp.eq.s32.totalorder %s26, 0
      %p137 = por %p135, %p136
      %s139 = sadd.s32 %s138, 1
      %p142 = scmp.eq.s32.totalorder %s20, 1
      %p143 = scmp.ne.s32.totalorder %s138, %s140
      %p144 = scmp.eq.s32.totalorder %s20, 0
      %p145 = por %p143, %p144
      %p146 = scmp.ne.s32.totalorder %s138, %s140
      %p147 = scmp.eq.s32.totalorder %s25, 1
      %p148 = por %p146, %p147
      %p149 = scmp.ne.s32.totalorder %s140, %s141
      %p150 = scmp.eq.s32.totalorder %s25, 0
      %p151 = por %p149, %p150
      %p152 = scmp.ne.s32.totalorder %s140, %s141
      %p153 = scmp.eq.s32.totalorder %s26, 1
      %p154 = por %p152, %p153
      %p156 = scmp.ne.s32.totalorder %s141, %s155
      %p157 = scmp.eq.s32.totalorder %s26, 0
      %p158 = por %p156, %p157
      %s160 = sadd.s32 %s159, 1
      %p163 = scmp.eq.s32.totalorder %s20, 1
      %p164 = scmp.ne.s32.totalorder %s159, %s161
      %p165 = scmp.eq.s32.totalorder %s20, 0
      %p166 = por %p164, %p165
      %p167 = scmp.ne.s32.totalorder %s159, %s161
      %p168 = scmp.eq.s32.totalorder %s25, 1
      %p169 = por %p167, %p168
      %p170 = scmp.ne.s32.totalorder %s161, %s162
      %p171 = scmp.eq.s32.totalorder %s25, 0
      %p172 = por %p170, %p171
      %p173 = scmp.ne.s32.totalorder %s161, %s162
      %p174 = scmp.eq.s32.totalorder %s26, 1
      %p175 = por %p173, %p174
      %p177 = scmp.ne.s32.totalorder %s162, %s176
      %p178 = scmp.eq.s32.totalorder %s26, 0
      %p179 = por %p177, %p178
      %s180 = ssub.s32 %s20, %s27
      %p181 = scmp.eq.s32.totalorder %s180, 0
      %s183 = sadd.s32 %s182, 1
      %s184 = scalar_select %p181, %s182, %s183
      %p187 = pneg %p181
      %p188 = scmp.eq.s32.totalorder %s20, 1
      %p189 = por %p187, %p188
      %p190 = scmp.ne.s32.totalorder %s182, %s185
      %p191 = scmp.eq.s32.totalorder %s20, 0
      %p192 = por %p190, %p191
      %p193 = scmp.ne.s32.totalorder %s182, %s185
      %p194 = scmp.eq.s32.totalorder %s25, 1
      %p195 = por %p193, %p194
      %p196 = scmp.ne.s32.totalorder %s185, %s186
      %p197 = scmp.eq.s32.totalorder %s25, 0
      %p198 = por %p196, %p197
      %p199 = scmp.ne.s32.totalorder %s185, %s186
      %p200 = scmp.eq.s32.totalorder %s26, 1
      %p201 = por %p199, %p200
      %p203 = scmp.ne.s32.totalorder %s186, %s202
      %p204 = scmp.eq.s32.totalorder %s26, 0
      %p205 = por %p203, %p204
      %p206 = scmp.le.s32.totalorder 1, %s20
      %p207 = scmp.lt.s32.totalorder %s20, 3
      %p208 = pnand %p206, %p207
      %p209 = pneg %p208
      // Predicated region
      $region9: #{tpu_custom_call.1} parent=5 // pred_check
        _
      $region10: #{tpu_custom_call.1} parent=5 // pred_check_branch
        %211 = sbr.rel (%p208) target = $region12
      $region11: #{tpu_custom_call.1} parent=5 // pred_region
        %s212 = ssub.s32 %s20, 1
        // Predicated region
        $region13: #{tpu_custom_call.1} parent=11 // pred_check
          %p213 = pneg %p67
        $region14: #{tpu_custom_call.1} parent=11 // pred_check_branch
          %215 = sbr.rel (%p213) target = $region16
        $region15: #{tpu_custom_call.1} parent=11 // pred_region
          _
        $region16: #{tpu_custom_call.1} parent=11 // pred_fallthru
          _
        // Predicated region
        $region17: #{tpu_custom_call.1} parent=11 // pred_check
          %p216 = pneg %p88
        $region18: #{tpu_custom_call.1} parent=11 // pred_check_branch
          %218 = sbr.rel (%p216) target = $region20
        $region19: #{tpu_custom_call.1} parent=11 // pred_region
          _
        $region20: #{tpu_custom_call.1} parent=11 // pred_fallthru
          _
        // Predicated region
        $region21: #{tpu_custom_call.1} parent=11 // pred_check
          %p219 = pneg %p109
        $region22: #{tpu_custom_call.1} parent=11 // pred_check_branch
          %221 = sbr.rel (%p219) target = $region24
        $region23: #{tpu_custom_call.1} parent=11 // pred_region
          %s223 = ssub.s32 128, 128
          %224 = vsyncadd [#allocation6], %s223
          %s226 = sshll.u32 [#allocation5], 4
          %s227 = int_to_ptr.vmem [resolvable:$true] %s226
          %229 = dma.hbm_to_vmem [thread:$0]  %s3, 128, %s227, [#allocation6]
        $region24: #{tpu_custom_call.1} parent=11 // pred_fallthru
          _
        // Predicated region
        $region25: #{tpu_custom_call.1} parent=11 // pred_check
          %p230 = pneg %p130
        $region26: #{tpu_custom_call.1} parent=11 // pred_check_branch
          %232 = sbr.rel (%p230) target = $region28
        $region27: #{tpu_custom_call.1} parent=11 // pred_region
          _
        $region28: #{tpu_custom_call.1} parent=11 // pred_fallthru
          _
        // Predicated region
        $region29: #{tpu_custom_call.1} parent=11 // pred_check
          %p233 = pneg %p151
        $region30: #{tpu_custom_call.1} parent=11 // pred_check_branch
          %235 = sbr.rel (%p233) target = $region32
        $region31: #{tpu_custom_call.1} parent=11 // pred_region
          _
        $region32: #{tpu_custom_call.1} parent=11 // pred_fallthru
          _
        // Predicated region
        $region33: #{tpu_custom_call.1} parent=11 // pred_check
          %p236 = pneg %p172
        $region34: #{tpu_custom_call.1} parent=11 // pred_check_branch
          %238 = sbr.rel (%p236) target = $region36
        $region35: #{tpu_custom_call.1} parent=11 // pred_region
          _
        $region36: #{tpu_custom_call.1} parent=11 // pred_fallthru
          _
      $region12: #{tpu_custom_call.1} parent=5 // pred_fallthru
        _
      %p239 = scmp.lt.s32.totalorder %s20, 2
      // Predicated region
      $region37: #{tpu_custom_call.1} parent=5 // pred_check
        %p240 = pneg %p239
      $region38: #{tpu_custom_call.1} parent=5 // pred_check_branch
        %242 = sbr.rel (%p240) target = $region40
      $region39: #{tpu_custom_call.1} parent=5 // pred_region
        // Predicated region
        $region41: #{tpu_custom_call.1} parent=39 // pred_check
          %p243 = pneg %p40
        $region42: #{tpu_custom_call.1} parent=39 // pred_check_branch
          %245 = sbr.rel (%p243) target = $region44
        $region43: #{tpu_custom_call.1} parent=39 // pred_region
          %s246 = sand.u32 %s30, 1
          %s247 = scalar_lea.sflag [#allocation3], %s246
          %s248 = sand.u32 %s30, 1
          %s249 = smul.addr %s248, 64
          %s250 = scalar_lea.vmem [#allocation2], %s249
          %s251 = smul.u32 4, %s20
          %s253 = ssub.s32 1024, 1024
          %254 = vsyncadd %s247, %s253
          %s255 = smul.addr %s251, 128
          %s256 = scalar_lea.hbm %s0, %s255
          %s257 = sshll.u32 %s250, 4
          %s258 = int_to_ptr.vmem [resolvable:$true] %s257
          %263 = dma.hbm_to_vmem [thread:$0]  %s256, 1024, %s258, %s247, 1024, 512, 32
        $region44: #{tpu_custom_call.1} parent=39 // pred_fallthru
          _
      $region40: #{tpu_custom_call.1} parent=5 // pred_fallthru
        _
      %p264 = scmp.le.s32.totalorder 1, %s20
      %p265 = scmp.lt.s32.totalorder %s20, 3
      %p266 = pnand %p264, %p265
      %p267 = pneg %p266
      // Predicated region
      $region45: #{tpu_custom_call.1} parent=5 // pred_check
        _
      $region46: #{tpu_custom_call.1} parent=5 // pred_check_branch
        %269 = sbr.rel (%p266) target = $region48
      $region47: #{tpu_custom_call.1} parent=5 // pred_region
        %s270 = ssub.s32 %s20, 1
        %s271 = sand.u32 %s33, 1
        %s272 = scalar_lea.sflag [#allocation3], %s271
        %s273 = sand.u32 %s33, 1
        %s274 = smul.addr %s273, 64
        %s275 = scalar_lea.vmem [#allocation2], %s274
        // Predicated region
        $region49: #{tpu_custom_call.1} parent=47 // pred_check
          %p276 = pneg %p46
        $region50: #{tpu_custom_call.1} parent=47 // pred_check_branch
          %278 = sbr.rel (%p276) target = $region52
        $region51: #{tpu_custom_call.1} parent=47 // pred_region
          %279 = dma.done %s272, 1024
        $region52: #{tpu_custom_call.1} parent=47 // pred_fallthru
          _
        // Predicated region
        $region53: #{tpu_custom_call.1} parent=47 // pred_check
          %p280 = pneg %p109
        $region54: #{tpu_custom_call.1} parent=47 // pred_check_branch
          %282 = sbr.rel (%p280) target = $region56
        $region55: #{tpu_custom_call.1} parent=47 // pred_region
          %283 = dma.done [#allocation6], 128
        $region56: #{tpu_custom_call.1} parent=47 // pred_fallthru
          _
        %s284 = sand.u32 %s33, 1
        %s285 = scalar_lea.sflag [#allocation3], %s284
        %s286 = sand.u32 %s33, 1
        %s287 = smul.addr %s286, 64
        %s288 = scalar_lea.vmem [#allocation2], %s287
        %p289 = pneg %p46
        %p290 = pneg %p43
        %p291 = pneg %p67
        %p292 = pneg %p64
        %p293 = pneg %p88
        %p294 = pneg %p85
        %p295 = pneg %p109
        %p296 = pneg %p106
        %p297 = pneg %p130
        %p298 = pneg %p127
        %p299 = pneg %p151
        %p300 = pneg %p148
        %p301 = pneg %p172
        %p302 = pneg %p169
        %p303 = pneg %p198
        %p304 = pneg %p195
        %s305 = sand.u32 %s185, 1
        %s306 = scalar_lea.sflag [#allocation4], %s305
        %s307 = sand.u32 %s185, 1
        %s308 = smul.addr %s307, 64
        %s309 = scalar_lea.vmem [#allocation7], %s308
        %s310 = smul.u32 4, %s25
        %s311 = smul.u32 4, %s25
        %v312 = vld [vmem:[%s275] sm:$0xff]
        %v313 = vld [vmem:[%s275 + $0x8] sm:$0xff]
        %v314 = vld [vmem:[%s275 + $0x10] sm:$0xff]
        %v315 = vld [vmem:[%s275 + $0x18] sm:$0xff]
        %v316 = vld [vmem:[%s275 + $0x20] sm:$0xff]
        %v317 = vld [vmem:[%s275 + $0x28] sm:$0xff]
        %v318 = vld [vmem:[%s275 + $0x30] sm:$0xff]
        %v319 = vld [vmem:[%s275 + $0x38] sm:$0xff]
        %v320 = vld [vmem:[%s1] sm:$0xff]
        %v321 = vld [vmem:[%s2] sm:$0xff]
        %323 = vset.pattern.permute.xlu0 0
        %324 = vperm.xlu0 %323, %v321
        %v325 = vpop.permute.xlu0 %324
        %vm327 = vcmask 130048
        %v329 = vsel %vm327, %v320, 0
        %331 = vmatprep.subr.mxu0 %v313
        %332 = vmatpush1.msra.mxu0 %v312
        %333 = vmatprep.subr.mxu0 %v317
        %334 = vmatpush1.msra.mxu0 %v316
        %335 = vmatprep.subr.mxu0 0.0
        %336 = vmatpush1.msra.mxu0 0.0
        %337 = vmatprep.subr.mxu0 0.0
        %338 = vmatpush1.msra.mxu0 0.0
        %339 = vmatprep.subr.mxu0 0.0
        %340 = vmatpush1.msra.mxu0 0.0
        %341 = vmatprep.subr.mxu0 0.0
        %342 = vmatpush1.msra.mxu0 0.0
        %343 = vmatprep.subr.mxu0 0.0
        %344 = vmatpush1.msra.mxu0 0.0
        %345 = vmatprep.subr.mxu0 0.0
        %346 = vmatpush1.msra.mxu0 0.0
        %347 = vmatprep.subr.mxu0 0.0
        %348 = vmatpush1.msra.mxu0 0.0
        %349 = vmatprep.subr.mxu0 0.0
        %350 = vmatpush1.msra.mxu0 0.0
        %351 = vmatprep.subr.mxu0 0.0
        %352 = vmatpush1.msra.mxu0 0.0
        %353 = vmatprep.subr.mxu0 0.0
        %354 = vmatpush1.msra.mxu0 0.0
        %355 = vmatprep.subr.mxu0 0.0
        %356 = vmatpush1.msra.mxu0 0.0
        %357 = vmatprep.subr.mxu0 0.0
        %358 = vmatpush1.msra.mxu0 0.0
        %359 = vmatprep.subr.mxu0 0.0
        %360 = vmatpush1.msra.mxu0 0.0
        %361 = vmatprep.subr.mxu0 0.0
        %362 = vmatpush1.msra.mxu0 0.0
        %363 = vmatprep.subr.mxu0 0.0
        %364 = vmatpush1.msra.mxu0 0.0
        %365 = vmatprep.subr.mxu0 0.0
        %366 = vmatpush1.msra.mxu0 0.0
        %367 = vmatprep.subr.mxu0 0.0
        %368 = vmatpush1.msra.mxu0 0.0
        %369 = vmatprep.subr.mxu0 0.0
        %370 = vmatpush1.msra.mxu0 0.0
        %371 = vmatprep.subr.mxu0 0.0
        %372 = vmatpush1.msra.mxu0 0.0
        %373 = vmatprep.subr.mxu0 0.0
        %374 = vmatpush1.msra.mxu0 0.0
        %375 = vmatprep.subr.mxu0 0.0
        %376 = vmatpush1.msra.mxu0 0.0
        %377 = vmatprep.subr.mxu0 0.0
        %378 = vmatpush1.msra.mxu0 0.0
        %379 = vmatprep.subr.mxu0 0.0
        %380 = vmatpush1.msra.mxu0 0.0
        %381 = vmatprep.subr.mxu0 0.0
        %382 = vmatpush1.msra.mxu0 0.0
        %383 = vmatprep.subr.mxu0 0.0
        %384 = vmatpush1.msra.mxu0 0.0
        %385 = vmatprep.subr.mxu0 0.0
        %386 = vmatpush1.msra.mxu0 0.0
        %387 = vmatprep.subr.mxu0 0.0
        %388 = vmatpush1.msra.mxu0 0.0
        %389 = vmatprep.subr.mxu0 0.0
        %390 = vmatpush1.msra.mxu0 0.0
        %391 = vmatprep.subr.mxu0 0.0
        %392 = vmatpush1.msra.mxu0 0.0
        %393 = vmatprep.subr.mxu0 0.0
        %394 = vmatpush1.msra.mxu0 0.0
        %395 = vmatprep.mubr.f32.mxu0 0.0
        %396 = vmatmul.mubr.f32.gmra.mrb[0].mxu0 %v329
        %v397 = vpop.f32.mrb[0].mxu0
        %v398 = vadd.f32 %v325, %v397
        %v399 = vpop.f32.mrb[0].mxu0
        %v400 = vadd.f32 %v325, %v399
        %401 = vdwg.mxu0
        %402 = vmatprep.subr.mxu0 %v315
        %403 = vmatpush1.msra.mxu0 %v314
        %404 = vmatprep.subr.mxu0 %v319
        %405 = vmatpush1.msra.mxu0 %v318
        %406 = vmatprep.subr.mxu0 0.0
        %407 = vmatpush1.msra.mxu0 0.0
        %408 = vmatprep.subr.mxu0 0.0
        %409 = vmatpush1.msra.mxu0 0.0
        %410 = vmatprep.subr.mxu0 0.0
        %411 = vmatpush1.msra.mxu0 0.0
        %412 = vmatprep.subr.mxu0 0.0
        %413 = vmatpush1.msra.mxu0 0.0
        %414 = vmatprep.subr.mxu0 0.0
        %415 = vmatpush1.msra.mxu0 0.0
        %416 = vmatprep.subr.mxu0 0.0
        %417 = vmatpush1.msra.mxu0 0.0
        %418 = vmatprep.subr.mxu0 0.0
        %419 = vmatpush1.msra.mxu0 0.0
        %420 = vmatprep.subr.mxu0 0.0
        %421 = vmatpush1.msra.mxu0 0.0
        %422 = vmatprep.subr.mxu0 0.0
        %423 = vmatpush1.msra.mxu0 0.0
        %424 = vmatprep.subr.mxu0 0.0
        %425 = vmatpush1.msra.mxu0 0.0
        %426 = vmatprep.subr.mxu0 0.0
        %427 = vmatpush1.msra.mxu0 0.0
        %428 = vmatprep.subr.mxu0 0.0
        %429 = vmatpush1.msra.mxu0 0.0
        %430 = vmatprep.subr.mxu0 0.0
        %431 = vmatpush1.msra.mxu0 0.0
        %432 = vmatprep.subr.mxu0 0.0
        %433 = vmatpush1.msra.mxu0 0.0
        %434 = vmatprep.subr.mxu0 0.0
        %435 = vmatpush1.msra.mxu0 0.0
        %436 = vmatprep.subr.mxu0 0.0
        %437 = vmatpush1.msra.mxu0 0.0
        %438 = vmatprep.subr.mxu0 0.0
        %439 = vmatpush1.msra.mxu0 0.0
        %440 = vmatprep.subr.mxu0 0.0
        %441 = vmatpush1.msra.mxu0 0.0
        %442 = vmatprep.subr.mxu0 0.0
        %443 = vmatpush1.msra.mxu0 0.0
        %444 = vmatprep.subr.mxu0 0.0
        %445 = vmatpush1.msra.mxu0 0.0
        %446 = vmatprep.subr.mxu0 0.0
        %447 = vmatpush1.msra.mxu0 0.0
        %448 = vmatprep.subr.mxu0 0.0
        %449 = vmatpush1.msra.mxu0 0.0
        %450 = vmatprep.subr.mxu0 0.0
        %451 = vmatpush1.msra.mxu0 0.0
        %452 = vmatprep.subr.mxu0 0.0
        %453 = vmatpush1.msra.mxu0 0.0
        %454 = vmatprep.subr.mxu0 0.0
        %455 = vmatpush1.msra.mxu0 0.0
        %456 = vmatprep.subr.mxu0 0.0
        %457 = vmatpush1.msra.mxu0 0.0
        %458 = vmatprep.subr.mxu0 0.0
        %459 = vmatpush1.msra.mxu0 0.0
        %460 = vmatprep.subr.mxu0 0.0
        %461 = vmatpush1.msra.mxu0 0.0
        %462 = vmatprep.subr.mxu0 0.0
        %463 = vmatpush1.msra.mxu0 0.0
        %464 = vmatprep.subr.mxu0 0.0
        %465 = vmatpush1.msra.mxu0 0.0
        %466 = vmatprep.mubr.f32.mxu0 0.0
        %467 = vmatmul.mubr.f32.gmra.mrb[0].mxu0 %v329
        %v468 = vpop.f32.mrb[0].mxu0
        %v469 = vadd.f32 %v325, %v468
        %v470 = vpop.f32.mrb[0].mxu0
        %v471 = vadd.f32 %v325, %v470
        %472 = vdwg.mxu0
        %v473 = vmax.f32 %v398, 0.0
        %v474 = vmax.f32 %v400, 0.0
        %v475 = vmax.f32 %v469, 0.0
        %v476 = vmax.f32 %v471, 0.0
        %v477 = vld [vmem:[%s6] sm:$0xff]
        %v478 = vld [vmem:[%s6 + $0x8] sm:$0xff]
        %v479 = vld [vmem:[%s6 + $0x10] sm:$0xff]
        %v480 = vld [vmem:[%s6 + $0x18] sm:$0xff]
        %v481 = vld [vmem:[%s6 + $0x20] sm:$0x1]
        %v482 = vld [vmem:[%s6 + $0x28] sm:$0x1]
        %v483 = vld [vmem:[%s6 + $0x30] sm:$0x1]
        %v484 = vld [vmem:[%s6 + $0x38] sm:$0x1]
        %v485 = vld [vmem:[#allocation5] sm:$0xff]
        %487 = vset.pattern.permute.xlu0 4
        %488 = vperm.xlu0 %487, %v485
        %v489 = vpop.permute.xlu0 %488
        %v491 = vmul.f32 %v473, %v489
        %v492 = vmul.f32 %v474, %v489
        %v493 = vmul.f32 %v475, %v489
        %v494 = vmul.f32 %v476, %v489
        %496 = vrot.lane.b32.xlu0 %v476, 17
        %v497 = vpop.permute.xlu0 %496
        %502 = vrot.lane.b32.xlu0 %v473, 17
        %v503 = vpop.permute.xlu0 %502
        %504 = vrot.lane.b32.xlu0 %v474, 17
        %v505 = vpop.permute.xlu0 %504
        %506 = vrot.lane.b32.xlu0 %v475, 17
        %v507 = vpop.permute.xlu0 %506
        %vm508 = vcmask 138240
        %v509 = vsel %vm508, %v503, %v505
        %v510 = vsel %vm508, %v505, %v507
        %v511 = vsel %vm508, %v507, %v497
        %v516 = vsel %vm508, %v497, %v503
        %v517 = vlaneseq
        %v518 = vshrl.u32 %v517, 7
        %v519 = vsub.s32 0, %v518
        %v520 = vrot.slane %v477, %v519
        %v521 = vlaneseq
        %v522 = vshrl.u32 %v521, 7
        %v523 = vsub.s32 0, %v522
        %v524 = vrot.slane %v478, %v523
        %v525 = vlaneseq
        %v526 = vshrl.u32 %v525, 7
        %v527 = vsub.s32 0, %v526
        %v528 = vrot.slane %v479, %v527
        %v529 = vlaneseq
        %v530 = vshrl.u32 %v529, 7
        %v531 = vsub.s32 0, %v530
        %v532 = vrot.slane %v480, %v531
        %v533 = vmul.f32 %v516, %v520
        %v534 = vmul.f32 %v509, %v524
        %v535 = vmul.f32 %v510, %v528
        %v536 = vmul.f32 %v511, %v532
        %537 = vset.pattern.permute.xlu0 0
        %538 = vperm.xlu0 %537, %v485
        %v539 = vpop.permute.xlu0 %538
        %v541 = vmul.f32 %v533, %v539
        %v542 = vmul.f32 %v534, %v539
        %v543 = vmul.f32 %v535, %v539
        %v544 = vmul.f32 %v536, %v539
        %v545 = vadd.f32 %v491, %v541
        %v546 = vadd.f32 %v492, %v542
        %v547 = vadd.f32 %v493, %v543
        %v548 = vadd.f32 %v494, %v544
        %549 = vrot.lane.b32.xlu0 %v476, 16
        %v550 = vpop.permute.xlu0 %549
        %552 = vrot.lane.b32.xlu0 %v473, 16
        %v553 = vpop.permute.xlu0 %552
        %554 = vrot.lane.b32.xlu0 %v474, 16
        %v555 = vpop.permute.xlu0 %554
        %556 = vrot.lane.b32.xlu0 %v475, 16
        %v557 = vpop.permute.xlu0 %556
        %v558 = vsel %vm327, %v553, %v555
        %v559 = vsel %vm327, %v555, %v557
        %v560 = vsel %vm327, %v557, %v550
        %v565 = vsel %vm327, %v550, %v553
        %v566 = vlaneseq
        %v567 = vshrl.u32 %v566, 7
        %v568 = vsub.s32 1, %v567
        %v569 = vrot.slane %v477, %v568
        %v570 = vlaneseq
        %v571 = vshrl.u32 %v570, 7
        %v572 = vsub.s32 1, %v571
        %v573 = vrot.slane %v478, %v572
        %v574 = vlaneseq
        %v575 = vshrl.u32 %v574, 7
        %v576 = vsub.s32 1, %v575
        %v577 = vrot.slane %v479, %v576
        %v578 = vlaneseq
        %v579 = vshrl.u32 %v578, 7
        %v580 = vsub.s32 1, %v579
        %v581 = vrot.slane %v480, %v580
        %v582 = vmul.f32 %v565, %v569
        %v583 = vmul.f32 %v558, %v573
        %v584 = vmul.f32 %v559, %v577
        %v585 = vmul.f32 %v560, %v581
        %586 = vset.pattern.permute.xlu0 1
        %587 = vperm.xlu0 %586, %v485
        %v588 = vpop.permute.xlu0 %587
        %v590 = vmul.f32 %v582, %v588
        %v591 = vmul.f32 %v583, %v588
        %v592 = vmul.f32 %v584, %v588
        %v593 = vmul.f32 %v585, %v588
        %v594 = vadd.f32 %v545, %v590
        %v595 = vadd.f32 %v546, %v591
        %v596 = vadd.f32 %v547, %v592
        %v597 = vadd.f32 %v548, %v593
        %598 = vrot.lane.b32.xlu0 %v476, 15
        %v599 = vpop.permute.xlu0 %598
        %601 = vrot.lane.b32.xlu0 %v473, 15
        %v602 = vpop.permute.xlu0 %601
        %603 = vrot.lane.b32.xlu0 %v474, 15
        %v604 = vpop.permute.xlu0 %603
        %605 = vrot.lane.b32.xlu0 %v475, 15
        %v606 = vpop.permute.xlu0 %605
        %vm607 = vcmask 121856
        %v608 = vsel %vm607, %v602, %v604
        %v609 = vsel %vm607, %v604, %v606
        %v610 = vsel %vm607, %v606, %v599
        %v615 = vsel %vm607, %v599, %v602
        %v616 = vlaneseq
        %v617 = vshrl.u32 %v616, 7
        %v618 = vsub.s32 2, %v617
        %v619 = vrot.slane %v477, %v618
        %v620 = vlaneseq
        %v621 = vshrl.u32 %v620, 7
        %v622 = vsub.s32 2, %v621
        %v623 = vrot.slane %v478, %v622
        %v624 = vlaneseq
        %v625 = vshrl.u32 %v624, 7
        %v626 = vsub.s32 2, %v625
        %v627 = vrot.slane %v479, %v626
        %v628 = vlaneseq
        %v629 = vshrl.u32 %v628, 7
        %v630 = vsub.s32 2, %v629
        %v631 = vrot.slane %v480, %v630
        %v632 = vmul.f32 %v615, %v619
        %v633 = vmul.f32 %v608, %v623
        %v634 = vmul.f32 %v609, %v627
        %v635 = vmul.f32 %v610, %v631
        %636 = vset.pattern.permute.xlu0 2
        %637 = vperm.xlu0 %636, %v485
        %v638 = vpop.permute.xlu0 %637
        %v640 = vmul.f32 %v632, %v638
        %v641 = vmul.f32 %v633, %v638
        %v642 = vmul.f32 %v634, %v638
        %v643 = vmul.f32 %v635, %v638
        %v644 = vadd.f32 %v594, %v640
        %v645 = vadd.f32 %v595, %v641
        %v646 = vadd.f32 %v596, %v642
        %v647 = vadd.f32 %v597, %v643
        %648 = vrot.lane.b32.xlu0 %v476, 1
        %v649 = vpop.permute.xlu0 %648
        %651 = vrot.lane.b32.xlu0 %v473, 1
        %v652 = vpop.permute.xlu0 %651
        %653 = vrot.lane.b32.xlu0 %v474, 1
        %v654 = vpop.permute.xlu0 %653
        %655 = vrot.lane.b32.xlu0 %v475, 1
        %v656 = vpop.permute.xlu0 %655
        %vm657 = vcmask 7168
        %v658 = vsel %vm657, %v652, %v654
        %v659 = vsel %vm657, %v654, %v656
        %v660 = vsel %vm657, %v656, %v649
        %v665 = vsel %vm657, %v649, %v652
        %v666 = vlaneseq
        %v667 = vshrl.u32 %v666, 7
        %v668 = vsub.s32 3, %v667
        %v669 = vrot.slane %v477, %v668
        %v670 = vlaneseq
        %v671 = vshrl.u32 %v670, 7
        %v672 = vsub.s32 3, %v671
        %v673 = vrot.slane %v478, %v672
        %v674 = vlaneseq
        %v675 = vshrl.u32 %v674, 7
        %v676 = vsub.s32 3, %v675
        %v677 = vrot.slane %v479, %v676
        %v678 = vlaneseq
        %v679 = vshrl.u32 %v678, 7
        %v680 = vsub.s32 3, %v679
        %v681 = vrot.slane %v480, %v680
        %v682 = vmul.f32 %v665, %v669
        %v683 = vmul.f32 %v658, %v673
        %v684 = vmul.f32 %v659, %v677
        %v685 = vmul.f32 %v660, %v681
        %686 = vset.pattern.permute.xlu0 3
        %687 = vperm.xlu0 %686, %v485
        %v688 = vpop.permute.xlu0 %687
        %v690 = vmul.f32 %v682, %v688
        %v691 = vmul.f32 %v683, %v688
        %v692 = vmul.f32 %v684, %v688
        %v693 = vmul.f32 %v685, %v688
        %v694 = vadd.f32 %v644, %v690
        %v695 = vadd.f32 %v645, %v691
        %v696 = vadd.f32 %v646, %v692
        %v697 = vadd.f32 %v647, %v693
        %698 = vrot.lane.b32.xlu0 %v473, 127
        %v699 = vpop.permute.xlu0 %698
        %700 = vrot.lane.b32.xlu0 %v474, 127
        %v701 = vpop.permute.xlu0 %700
        %702 = vrot.lane.b32.xlu0 %v475, 127
        %v703 = vpop.permute.xlu0 %702
        %704 = vrot.lane.b32.xlu0 %v476, 127
        %v705 = vpop.permute.xlu0 %704
        %vm706 = vcmask 1039360
        %v707 = vsel %vm706, %v699, %v701
        %v708 = vsel %vm706, %v701, %v703
        %v709 = vsel %vm706, %v703, %v705
        %v715 = vsel %vm706, %v705, %v699
        %v716 = vlaneseq
        %v717 = vshrl.u32 %v716, 7
        %v718 = vsub.s32 5, %v717
        %v719 = vrot.slane %v477, %v718
        %v720 = vlaneseq
        %v721 = vshrl.u32 %v720, 7
        %v722 = vsub.s32 5, %v721
        %v723 = vrot.slane %v478, %v722
        %v724 = vlaneseq
        %v725 = vshrl.u32 %v724, 7
        %v726 = vsub.s32 5, %v725
        %v727 = vrot.slane %v479, %v726
        %v728 = vlaneseq
        %v729 = vshrl.u32 %v728, 7
        %v730 = vsub.s32 5, %v729
        %v731 = vrot.slane %v480, %v730
        %v732 = vmul.f32 %v707, %v719
        %v733 = vmul.f32 %v708, %v723
        %v734 = vmul.f32 %v709, %v727
        %v735 = vmul.f32 %v715, %v731
        %736 = vset.pattern.permute.xlu0 5
        %737 = vperm.xlu0 %736, %v485
        %v738 = vpop.permute.xlu0 %737
        %v740 = vmul.f32 %v732, %v738
        %v741 = vmul.f32 %v733, %v738
        %v742 = vmul.f32 %v734, %v738
        %v743 = vmul.f32 %v735, %v738
        %v744 = vadd.f32 %v694, %v740
        %v745 = vadd.f32 %v695, %v741
        %v746 = vadd.f32 %v696, %v742
        %v747 = vadd.f32 %v697, %v743
        %748 = vrot.lane.b32.xlu0 %v473, 113
        %v749 = vpop.permute.xlu0 %748
        %750 = vrot.lane.b32.xlu0 %v474, 113
        %v751 = vpop.permute.xlu0 %750
        %752 = vrot.lane.b32.xlu0 %v475, 113
        %v753 = vpop.permute.xlu0 %752
        %754 = vrot.lane.b32.xlu0 %v476, 113
        %v755 = vpop.permute.xlu0 %754
        %vm756 = vcmask 924672
        %v757 = vsel %vm756, %v749, %v751
        %v758 = vsel %vm756, %v751, %v753
        %v759 = vsel %vm756, %v753, %v755
        %v765 = vsel %vm756, %v755, %v749
        %v766 = vlaneseq
        %v767 = vshrl.u32 %v766, 7
        %v768 = vsub.s32 6, %v767
        %v769 = vrot.slane %v477, %v768
        %v770 = vlaneseq
        %v771 = vshrl.u32 %v770, 7
        %v772 = vsub.s32 6, %v771
        %v773 = vrot.slane %v478, %v772
        %v774 = vlaneseq
        %v775 = vshrl.u32 %v774, 7
        %v776 = vsub.s32 6, %v775
        %v777 = vrot.slane %v479, %v776
        %v778 = vlaneseq
        %v779 = vshrl.u32 %v778, 7
        %v780 = vsub.s32 6, %v779
        %v781 = vrot.slane %v480, %v780
        %v782 = vmul.f32 %v757, %v769
        %v783 = vmul.f32 %v758, %v773
        %v784 = vmul.f32 %v759, %v777
        %v785 = vmul.f32 %v765, %v781
        %786 = vset.pattern.permute.xlu0 6
        %787 = vperm.xlu0 %786, %v485
        %v788 = vpop.permute.xlu0 %787
        %v790 = vmul.f32 %v782, %v788
        %v791 = vmul.f32 %v783, %v788
        %v792 = vmul.f32 %v784, %v788
        %v793 = vmul.f32 %v785, %v788
        %v794 = vadd.f32 %v744, %v790
        %v795 = vadd.f32 %v745, %v791
        %v796 = vadd.f32 %v746, %v792
        %v797 = vadd.f32 %v747, %v793
        %798 = vrot.lane.b32.xlu0 %v473, 112
        %v799 = vpop.permute.xlu0 %798
        %800 = vrot.lane.b32.xlu0 %v474, 112
        %v801 = vpop.permute.xlu0 %800
        %802 = vrot.lane.b32.xlu0 %v475, 112
        %v803 = vpop.permute.xlu0 %802
        %804 = vrot.lane.b32.xlu0 %v476, 112
        %v805 = vpop.permute.xlu0 %804
        %vm806 = vcmask 916480
        %v807 = vsel %vm806, %v799, %v801
        %v808 = vsel %vm806, %v801, %v803
        %v809 = vsel %vm806, %v803, %v805
        %v815 = vsel %vm806, %v805, %v799
        %v816 = vlaneseq
        %v817 = vshrl.u32 %v816, 7
        %v818 = vsub.s32 7, %v817
        %v819 = vrot.slane %v477, %v818
        %v820 = vlaneseq
        %v821 = vshrl.u32 %v820, 7
        %v822 = vsub.s32 7, %v821
        %v823 = vrot.slane %v478, %v822
        %v824 = vlaneseq
        %v825 = vshrl.u32 %v824, 7
        %v826 = vsub.s32 7, %v825
        %v827 = vrot.slane %v479, %v826
        %v828 = vlaneseq
        %v829 = vshrl.u32 %v828, 7
        %v830 = vsub.s32 7, %v829
        %v831 = vrot.slane %v480, %v830
        %v832 = vmul.f32 %v807, %v819
        %v833 = vmul.f32 %v808, %v823
        %v834 = vmul.f32 %v809, %v827
        %v835 = vmul.f32 %v815, %v831
        %836 = vset.pattern.permute.xlu0 7
        %837 = vperm.xlu0 %836, %v485
        %v838 = vpop.permute.xlu0 %837
        %v840 = vmul.f32 %v832, %v838
        %v841 = vmul.f32 %v833, %v838
        %v842 = vmul.f32 %v834, %v838
        %v843 = vmul.f32 %v835, %v838
        %v844 = vadd.f32 %v794, %v840
        %v845 = vadd.f32 %v795, %v841
        %v846 = vadd.f32 %v796, %v842
        %v847 = vadd.f32 %v797, %v843
        %848 = vrot.lane.b32.xlu0 %v473, 111
        %v849 = vpop.permute.xlu0 %848
        %850 = vrot.lane.b32.xlu0 %v474, 111
        %v851 = vpop.permute.xlu0 %850
        %852 = vrot.lane.b32.xlu0 %v475, 111
        %v853 = vpop.permute.xlu0 %852
        %854 = vrot.lane.b32.xlu0 %v476, 111
        %v855 = vpop.permute.xlu0 %854
        %vm856 = vcmask 908288
        %v857 = vsel %vm856, %v849, %v851
        %v858 = vsel %vm856, %v851, %v853
        %v859 = vsel %vm856, %v853, %v855
        %v865 = vsel %vm856, %v855, %v849
        %v866 = vlaneseq
        %v867 = vshrl.u32 %v866, 7
        %v868 = vsub.s32 0, %v867
        %v869 = vrot.slane %v481, %v868
        %v870 = vlaneseq
        %v871 = vshrl.u32 %v870, 7
        %v872 = vsub.s32 0, %v871
        %v873 = vrot.slane %v482, %v872
        %v874 = vlaneseq
        %v875 = vshrl.u32 %v874, 7
        %v876 = vsub.s32 0, %v875
        %v877 = vrot.slane %v483, %v876
        %v878 = vlaneseq
        %v879 = vshrl.u32 %v878, 7
        %v880 = vsub.s32 0, %v879
        %v881 = vrot.slane %v484, %v880
        %v882 = vmul.f32 %v857, %v869
        %v883 = vmul.f32 %v858, %v873
        %v884 = vmul.f32 %v859, %v877
        %v885 = vmul.f32 %v865, %v881
        %886 = vset.pattern.permute.xlu0 8
        %887 = vperm.xlu0 %886, %v485
        %v888 = vpop.permute.xlu0 %887
        %v890 = vmul.f32 %v882, %v888
        %v891 = vmul.f32 %v883, %v888
        %v892 = vmul.f32 %v884, %v888
        %v893 = vmul.f32 %v885, %v888
        %v894 = vadd.f32 %v844, %v890
        %v895 = vadd.f32 %v845, %v891
        %v896 = vadd.f32 %v846, %v892
        %v897 = vadd.f32 %v847, %v893
        %v898 = vld [vmem:[%s4] sm:$0xff]
        %v899 = vld [vmem:[%s4 + $0x8] sm:$0xff]
        %v900 = vld [vmem:[%s5] sm:$0xff]
        %v901 = vld [vmem:[%s5 + $0x8] sm:$0xff]
        %903 = vset.pattern.permute.xlu0 0
        %904 = vperm.xlu0 %903, %v900
        %v905 = vpop.permute.xlu0 %904
        %908 = vset.pattern.permute.xlu0 0
        %909 = vperm.xlu0 %908, %v901
        %v910 = vpop.permute.xlu0 %909
        %vm912 = vcmask 64512
        %v914 = vsel %vm912, %v898, 0
        %v917 = vsel %vm912, %v899, 0
        %919 = vmatprep.subr.mxu0 %v895
        %920 = vmatpush1.msra.mxu0 %v894
        %921 = vmatprep.subr.mxu0 0.0
        %922 = vmatpush1.msra.mxu0 0.0
        %923 = vmatprep.subr.mxu0 0.0
        %924 = vmatpush1.msra.mxu0 0.0
        %925 = vmatprep.subr.mxu0 0.0
        %926 = vmatpush1.msra.mxu0 0.0
        %927 = vmatprep.subr.mxu0 0.0
        %928 = vmatpush1.msra.mxu0 0.0
        %929 = vmatprep.subr.mxu0 0.0
        %930 = vmatpush1.msra.mxu0 0.0
        %931 = vmatprep.subr.mxu0 0.0
        %932 = vmatpush1.msra.mxu0 0.0
        %933 = vmatprep.subr.mxu0 0.0
        %934 = vmatpush1.msra.mxu0 0.0
        %935 = vmatprep.subr.mxu0 0.0
        %936 = vmatpush1.msra.mxu0 0.0
        %937 = vmatprep.subr.mxu0 0.0
        %938 = vmatpush1.msra.mxu0 0.0
        %939 = vmatprep.subr.mxu0 0.0
        %940 = vmatpush1.msra.mxu0 0.0
        %941 = vmatprep.subr.mxu0 0.0
        %942 = vmatpush1.msra.mxu0 0.0
        %943 = vmatprep.subr.mxu0 0.0
        %944 = vmatpush1.msra.mxu0 0.0
        %945 = vmatprep.subr.mxu0 0.0
        %946 = vmatpush1.msra.mxu0 0.0
        %947 = vmatprep.subr.mxu0 0.0
        %948 = vmatpush1.msra.mxu0 0.0
        %949 = vmatprep.subr.mxu0 0.0
        %950 = vmatpush1.msra.mxu0 0.0
        %951 = vmatprep.subr.mxu0 0.0
        %952 = vmatpush1.msra.mxu0 0.0
        %953 = vmatprep.subr.mxu0 0.0
        %954 = vmatpush1.msra.mxu0 0.0
        %955 = vmatprep.subr.mxu0 0.0
        %956 = vmatpush1.msra.mxu0 0.0
        %957 = vmatprep.subr.mxu0 0.0
        %958 = vmatpush1.msra.mxu0 0.0
        %959 = vmatprep.subr.mxu0 0.0
        %960 = vmatpush1.msra.mxu0 0.0
        %961 = vmatprep.subr.mxu0 0.0
        %962 = vmatpush1.msra.mxu0 0.0
        %963 = vmatprep.subr.mxu0 0.0
        %964 = vmatpush1.msra.mxu0 0.0
        %965 = vmatprep.subr.mxu0 0.0
        %966 = vmatpush1.msra.mxu0 0.0
        %967 = vmatprep.subr.mxu0 0.0
        %968 = vmatpush1.msra.mxu0 0.0
        %969 = vmatprep.subr.mxu0 0.0
        %970 = vmatpush1.msra.mxu0 0.0
        %971 = vmatprep.subr.mxu0 0.0
        %972 = vmatpush1.msra.mxu0 0.0
        %973 = vmatprep.subr.mxu0 0.0
        %974 = vmatpush1.msra.mxu0 0.0
        %975 = vmatprep.subr.mxu0 0.0
        %976 = vmatpush1.msra.mxu0 0.0
        %977 = vmatprep.subr.mxu0 0.0
        %978 = vmatpush1.msra.mxu0 0.0
        %979 = vmatprep.subr.mxu0 0.0
        %980 = vmatpush1.msra.mxu0 0.0
        %981 = vmatprep.subr.mxu0 0.0
        %982 = vmatpush1.msra.mxu0 0.0
        %983 = vmatprep.mubr.f32.mxu0 0.0
        %984 = vmatmul.mubr.f32.gmra.mrb[0].mxu0 %v914
        %v985 = vpop.f32.mrb[0].mxu0
        %v986 = vadd.f32 %v905, %v985
        %v987 = vpop.f32.mrb[0].mxu0
        %v988 = vadd.f32 %v905, %v987
        %989 = vmatprep.mubr.f32.mxu0 0.0
        %990 = vmatmul.mubr.f32.gmra.mrb[0].mxu0 %v917
        %v991 = vpop.f32.mrb[0].mxu0
        %v992 = vadd.f32 %v910, %v991
        %v993 = vpop.f32.mrb[0].mxu0
        %v994 = vadd.f32 %v910, %v993
        %995 = vdwg.mxu0
        %996 = vmatprep.subr.mxu0 %v897
        %997 = vmatpush1.msra.mxu0 %v896
        %998 = vmatprep.subr.mxu0 0.0
        %999 = vmatpush1.msra.mxu0 0.0
        %1000 = vmatprep.subr.mxu0 0.0
        %1001 = vmatpush1.msra.mxu0 0.0
        %1002 = vmatprep.subr.mxu0 0.0
        %1003 = vmatpush1.msra.mxu0 0.0
        %1004 = vmatprep.subr.mxu0 0.0
        %1005 = vmatpush1.msra.mxu0 0.0
        %1006 = vmatprep.subr.mxu0 0.0
        %1007 = vmatpush1.msra.mxu0 0.0
        %1008 = vmatprep.subr.mxu0 0.0
        %1009 = vmatpush1.msra.mxu0 0.0
        %1010 = vmatprep.subr.mxu0 0.0
        %1011 = vmatpush1.msra.mxu0 0.0
        %1012 = vmatprep.subr.mxu0 0.0
        %1013 = vmatpush1.msra.mxu0 0.0
        %1014 = vmatprep.subr.mxu0 0.0
        %1015 = vmatpush1.msra.mxu0 0.0
        %1016 = vmatprep.subr.mxu0 0.0
        %1017 = vmatpush1.msra.mxu0 0.0
        %1018 = vmatprep.subr.mxu0 0.0
        %1019 = vmatpush1.msra.mxu0 0.0
        %1020 = vmatprep.subr.mxu0 0.0
        %1021 = vmatpush1.msra.mxu0 0.0
        %1022 = vmatprep.subr.mxu0 0.0
        %1023 = vmatpush1.msra.mxu0 0.0
        %1024 = vmatprep.subr.mxu0 0.0
        %1025 = vmatpush1.msra.mxu0 0.0
        %1026 = vmatprep.subr.mxu0 0.0
        %1027 = vmatpush1.msra.mxu0 0.0
        %1028 = vmatprep.subr.mxu0 0.0
        %1029 = vmatpush1.msra.mxu0 0.0
        %1030 = vmatprep.subr.mxu0 0.0
        %1031 = vmatpush1.msra.mxu0 0.0
        %1032 = vmatprep.subr.mxu0 0.0
        %1033 = vmatpush1.msra.mxu0 0.0
        %1034 = vmatprep.subr.mxu0 0.0
        %1035 = vmatpush1.msra.mxu0 0.0
        %1036 = vmatprep.subr.mxu0 0.0
        %1037 = vmatpush1.msra.mxu0 0.0
        %1038 = vmatprep.subr.mxu0 0.0
        %1039 = vmatpush1.msra.mxu0 0.0
        %1040 = vmatprep.subr.mxu0 0.0
        %1041 = vmatpush1.msra.mxu0 0.0
        %1042 = vmatprep.subr.mxu0 0.0
        %1043 = vmatpush1.msra.mxu0 0.0
        %1044 = vmatprep.subr.mxu0 0.0
        %1045 = vmatpush1.msra.mxu0 0.0
        %1046 = vmatprep.subr.mxu0 0.0
        %1047 = vmatpush1.msra.mxu0 0.0
        %1048 = vmatprep.subr.mxu0 0.0
        %1049 = vmatpush1.msra.mxu0 0.0
        %1050 = vmatprep.subr.mxu0 0.0
        %1051 = vmatpush1.msra.mxu0 0.0
        %1052 = vmatprep.subr.mxu0 0.0
        %1053 = vmatpush1.msra.mxu0 0.0
        %1054 = vmatprep.subr.mxu0 0.0
        %1055 = vmatpush1.msra.mxu0 0.0
        %1056 = vmatprep.subr.mxu0 0.0
        %1057 = vmatpush1.msra.mxu0 0.0
        %1058 = vmatprep.subr.mxu0 0.0
        %1059 = vmatpush1.msra.mxu0 0.0
        %1060 = vmatprep.mubr.f32.mxu0 0.0
        %1061 = vmatmul.mubr.f32.gmra.mrb[0].mxu0 %v914
        %v1062 = vpop.f32.mrb[0].mxu0
        %v1063 = vadd.f32 %v905, %v1062
        %v1064 = vpop.f32.mrb[0].mxu0
        %v1065 = vadd.f32 %v905, %v1064
        %1066 = vmatprep.mubr.f32.mxu0 0.0
        %1067 = vmatmul.mubr.f32.gmra.mrb[0].mxu0 %v917
        %v1068 = vpop.f32.mrb[0].mxu0
        %v1069 = vadd.f32 %v910, %v1068
        %v1070 = vpop.f32.mrb[0].mxu0
        %v1071 = vadd.f32 %v910, %v1070
        %1072 = vdwg.mxu0
        %v1073 = vadd.f32 %v986, %v312
        %v1074 = vadd.f32 %v988, %v313
        %v1075 = vadd.f32 %v1063, %v314
        %v1076 = vadd.f32 %v1065, %v315
        %v1077 = vadd.f32 %v992, %v316
        %v1078 = vadd.f32 %v994, %v317
        %v1079 = vadd.f32 %v1069, %v318
        %v1080 = vadd.f32 %v1071, %v319
        %v1081 = vmax.f32 %v1073, 0.0
        %v1082 = vmax.f32 %v1074, 0.0
        %v1083 = vmax.f32 %v1075, 0.0
        %v1084 = vmax.f32 %v1076, 0.0
        %v1085 = vmax.f32 %v1077, 0.0
        %v1086 = vmax.f32 %v1078, 0.0
        %v1087 = vmax.f32 %v1079, 0.0
        %v1088 = vmax.f32 %v1080, 0.0
        %1089 = vst [vmem:[%s309] sm:$0xff] %v1081
        %1090 = vst [vmem:[%s309 + $0x8] sm:$0xff] %v1082
        %1091 = vst [vmem:[%s309 + $0x10] sm:$0xff] %v1083
        %1092 = vst [vmem:[%s309 + $0x18] sm:$0xff] %v1084
        %1093 = vst [vmem:[%s309 + $0x20] sm:$0xff] %v1085
        %1094 = vst [vmem:[%s309 + $0x28] sm:$0xff] %v1086
        %1095 = vst [vmem:[%s309 + $0x30] sm:$0xff] %v1087
        %1096 = vst [vmem:[%s309 + $0x38] sm:$0xff] %v1088
        %s1097 = sand.u32 %s185, 1
        %s1098 = scalar_lea.sflag [#allocation4], %s1097
        %s1099 = sand.u32 %s185, 1
        %s1100 = smul.addr %s1099, 64
        %s1101 = scalar_lea.vmem [#allocation7], %s1100
        // Predicated region
        $region57: #{tpu_custom_call.1} parent=47 // pred_check
          %p1102 = pneg %p195
        $region58: #{tpu_custom_call.1} parent=47 // pred_check_branch
          %1104 = sbr.rel (%p1102) target = $region60
        $region59: #{tpu_custom_call.1} parent=47 // pred_region
          %s1105 = smul.u32 4, %s25
          %s1107 = ssub.s32 1024, 1024
          %1108 = vsyncadd %s1098, %s1107
          %s1109 = smul.addr %s1105, 128
          %s1110 = scalar_lea.hbm %s7, %s1109
          %s1111 = sshll.u32 %s1101, 4
          %s1112 = int_to_ptr.vmem [resolvable:$true] %s1111
          %1117 = dma.vmem_to_hbm [thread:$0]  %s1112, 1024, %s1110, %s1098, 512, 1024, 32
        $region60: #{tpu_custom_call.1} parent=47 // pred_fallthru
          _
      $region48: #{tpu_custom_call.1} parent=5 // pred_fallthru
        _
      %p1118 = scmp.le.s32.totalorder 2, %s20
      // Predicated region
      $region61: #{tpu_custom_call.1} parent=5 // pred_check
        %p1119 = pneg %p1118
      $region62: #{tpu_custom_call.1} parent=5 // pred_check_branch
        %1121 = sbr.rel (%p1119) target = $region64
      $region63: #{tpu_custom_call.1} parent=5 // pred_region
        %s1122 = ssub.s32 %s20, 2
        // Predicated region
        $region65: #{tpu_custom_call.1} parent=63 // pred_check
          %p1123 = pneg %p201
        $region66: #{tpu_custom_call.1} parent=63 // pred_check_branch
          %1125 = sbr.rel (%p1123) target = $region68
        $region67: #{tpu_custom_call.1} parent=63 // pred_region
          %s1126 = sand.u32 %s186, 1
          %s1127 = scalar_lea.sflag [#allocation4], %s1126
          %s1128 = sand.u32 %s186, 1
          %s1129 = smul.addr %s1128, 64
          %s1130 = scalar_lea.vmem [#allocation7], %s1129
          %1131 = dma.done %s1127, 1024
        $region68: #{tpu_custom_call.1} parent=63 // pred_fallthru
          _
      $region64: #{tpu_custom_call.1} parent=5 // pred_fallthru
        _
    $region6: #{tpu_custom_call.1} parent=1 // loop_footer
      %s24 = sadd.s32 1, %s20
    $region7: #{tpu_custom_call.1} parent=1 // loop_footer_branch
      %19 = sbr.rel target = $region3
    $region8: #{tpu_custom_call.1} parent=1 // loop_exit
      _
    %1132 = vsyncpa [#allocation3], 1
    %s1133 = scalar_lea.sflag [#allocation3], 1
    %1134 = vsyncpa %s1133, 1
    %1135 = vsyncpa [#allocation6], 1
    %1136 = vsyncpa [#allocation4], 1
    %s1137 = scalar_lea.sflag [#allocation4], 1
    %1138 = vsyncpa %s1137, 1

</llo_original>
